<compile_context>
chip_gen: v5e
topology: v5e:2x2
jax: 0.10.0
libtpu: 0.0.40
codegen_flags: <defaults>
</compile_context>

<pallas_src>
import jax
import jax.numpy as jnp
from jax.experimental import pallas as pl
from jax.experimental.pallas import tpu as pltpu


_NEG_SLOPE = 0.2
_MIN_SPLIT_BLOCK_BYTES = 512 * 1024   # don't split below this just for megacore


def _leaky_relu_kernel(x_ref, o_ref):
    x = x_ref[...]
    # leaky_relu(x, 0.2) == max(x, 0.2 * x) for floating dtypes (0 < slope < 1).
    # Single VPU mul + max; no compare-mask + select needed.
    o_ref[...] = jnp.maximum(x, x * jnp.asarray(_NEG_SLOPE, x.dtype))


def _round_up(a, b):
    return ((a + b - 1) // b) * b


def _sublane_multiple(dtype):
    # f32 -> 8, bf16/f16 -> 16, fp8/int8 -> 32 (sub-32-bit dtypes pack along sublanes).
    itemsize = jnp.dtype(dtype).itemsize
    return max(8, 32 // max(itemsize, 1))


def _pick_target_block_bytes():
    """Generation-aware default block size.

    v7x-class chips (64 MiB VMEM, ~3.2 TB/s HBM) benefit from ~6 MiB blocks
    (fewer grid steps; 2-in + 2-out double-buffering = 24 MiB < 32 MiB scoped
    limit).  v5e/v6e sit at the roofline knee by ~2-4 MiB, so use 4 MiB.
    """
    try:
        info = pltpu.get_tpu_info()
        vmem = int(getattr(info, "vmem_capacity_bytes", 0) or 0)
    except Exception:  # non-TPU backend / interpret mode / older jax
        vmem = 0
    if vmem and vmem <= 64 * 1024 * 1024:
        return 6 * 1024 * 1024   # v7x-class
    return 4 * 1024 * 1024       # v5e / v6e


def leaky_relu_pallas(x, *, target_block_bytes=None):
    """Elementwise F.leaky_relu(x, 0.2) via a Pallas TPU kernel (any float shape)."""
    orig_shape = x.shape
    dtype = x.dtype
    if not jnp.issubdtype(dtype, jnp.floating):
        # torch's leaky_relu does not support integer inputs either; the
        # max(x, 0.2*x) identity would silently become relu for ints.
        raise TypeError(f"leaky_relu_pallas requires a floating dtype, got {dtype}")

    itemsize = jnp.dtype(dtype).itemsize
    if target_block_bytes is None:
        target_block_bytes = _pick_target_block_bytes()

    flat = x.reshape(-1)
    n = flat.shape[0]
    if n == 0:
        return x

    sub = _sublane_multiple(dtype)

    # --- choose a 2-D view + tiling with zero extra HBM passes -------------
    lanes = None
    for cand in (1024, 512, 256, 128):
        if n % cand == 0:
            lanes = cand
            break

    if lanes is not None:
        # Main path: lane-dense slab, tile along rows (contiguous DMA blocks).
        rows = n // lanes
        x2d = flat.reshape(rows, lanes)
        row_bytes = lanes * itemsize

        tile_rows = max(sub, (target_block_bytes // row_bytes) // sub * sub)
        # Megacore: prefer >=2 grid steps (v7x has 2 TensorCores) if blocks
        # stay reasonably large.
        half_rows = _round_up(pl.cdiv(rows, 2), sub)
        if half_rows < rows and half_rows * row_bytes >= _MIN_SPLIT_BLOCK_BYTES:
            tile_rows = min(tile_rows, half_rows)
        if tile_rows >= rows:
            tile_rows = rows          # single block == full array dims (legal)

        grid = (pl.cdiv(rows, tile_rows),)
        block = (tile_rows, lanes)
        index_map = lambda i: (i, 0)
    else:
        # Fallback (n % 128 != 0): view as [small_rows, cols], tile the lane
        # axis with 128-multiple blocks; the partial last block is masked by
        # Pallas.  No pad, no slice, no concat.
        rows = 1
        for cand in (8 * sub, 4 * sub, 2 * sub, sub):
            if n % cand == 0:
                rows = cand
                break
        cols = n // rows
        x2d = flat.reshape(rows, cols)
        col_bytes = rows * itemsize

        tile_lanes = max(128, (target_block_bytes // col_bytes) // 128 * 128)
        if tile_lanes >= cols:
            tile_lanes = cols         # single block == full array dims (legal)

        grid = (pl.cdiv(cols, tile_lanes),)
        block = (rows, tile_lanes)
        index_map = lambda i: (0, i)

    # vmem limit: 2 double-buffered copies of input + output, plus headroom.
    # Keeps v5e (16 MiB scoped default) safe when blocks exceed ~4 MiB and
    # stays within v7x's 32 MiB scoped / 64 MiB physical VMEM.
    block_bytes = block[0] * block[1] * itemsize
    vmem_limit = max(8 * 1024 * 1024,
                     min(32 * 1024 * 1024, 4 * block_bytes + 4 * 1024 * 1024))

    out2d = pl.pallas_call(
        _leaky_relu_kernel,
        out_shape=jax.ShapeDtypeStruct(x2d.shape, dtype),
        grid_spec=pltpu.PrefetchScalarGridSpec(
            num_scalar_prefetch=0,
            grid=grid,
            in_specs=[pl.BlockSpec(block, index_map)],
            out_specs=pl.BlockSpec(block, index_map),
        ),
        compiler_params=pltpu.CompilerParams(
            dimension_semantics=("parallel",),
            vmem_limit_bytes=vmem_limit,
        ),
    )(x2d)

    return out2d.reshape(orig_shape)


if __name__ == "__main__":
    key = jax.random.PRNGKey(0)

    # NCHW input, small shape consistent with the module (any shape works).
    x = jax.random.normal(key, (2, 4, 16, 16), dtype=jnp.float32)
    out = jax.block_until_ready(leaky_relu_pallas(x))
    ref = jnp.where(x >= 0, x, 0.2 * x)
    assert out.shape == x.shape and out.dtype == x.dtype
    assert jnp.allclose(out, ref, atol=1e-6), "mismatch vs reference (lane-dense path)"

    # Element count not a multiple of 128 -> lane-masked fallback (no pad/slice).
    x2 = jax.random.normal(jax.random.PRNGKey(1), (3, 5, 7), dtype=jnp.float32)
    out2 = jax.block_until_ready(leaky_relu_pallas(x2))
    ref2 = jnp.where(x2 >= 0, x2, 0.2 * x2)
    assert out2.shape == x2.shape and out2.dtype == x2.dtype
    assert jnp.allclose(out2, ref2, atol=1e-6), "mismatch vs reference (masked path)"

    # bf16 path (16-row sublane alignment).
    x3 = jax.random.normal(jax.random.PRNGKey(2), (2, 8, 32, 128), dtype=jnp.bfloat16)
    out3 = jax.block_until_ready(leaky_relu_pallas(x3))
    ref3 = jnp.where(x3 >= 0, x3, jnp.asarray(0.2, jnp.bfloat16) * x3)
    assert out3.shape == x3.shape and out3.dtype == x3.dtype
    assert jnp.allclose(out3.astype(jnp.float32), ref3.astype(jnp.float32), atol=1e-2), \
        "mismatch vs reference (bf16 path)"

    print("KERNEL_OK")
</pallas_src>

<mosaic_0001>
module attributes {stable_mosaic.version = 11 : i64} {
  func.func @_leaky_relu_kernel(%arg0: i32, %arg1: memref<2x1024xf32, #tpu.memory_space<vmem>>, %arg2: memref<2x1024xf32, #tpu.memory_space<vmem>>) attributes {dimension_semantics = [#tpu.dimension_semantics<parallel>], iteration_bounds = array<i64: 1>, scalar_prefetch = 0 : i64, scratch_operands = 0 : i64, tpu.core_type = #tpu.core_type<tc>, window_params = [{transform_indices = @transform_0, window_bounds = array<i64: 2, 1024>}, {transform_indices = @transform_1, window_bounds = array<i64: 2, 1024>}]} {
    %c0 = arith.constant 0 : index
    %c0_0 = arith.constant 0 : index
    %0 = vector.load %arg1[%c0, %c0_0] : memref<2x1024xf32, #tpu.memory_space<vmem>>, vector<2x1024xf32>
    %cst = arith.constant 2.000000e-01 : f32
    %1 = vector.broadcast %cst : f32 to vector<2x1024xf32>
    %2 = arith.mulf %0, %1 : vector<2x1024xf32>
    %3 = arith.maximumf %0, %2 : vector<2x1024xf32>
    %c0_1 = arith.constant 0 : index
    %c0_2 = arith.constant 0 : index
    %4 = vector.load %arg2[%c0_1, %c0_2] : memref<2x1024xf32, #tpu.memory_space<vmem>>, vector<2x1024xf32>
    tpu.vector_store %arg2[%c0_1, %c0_2], %3 {strides = array<i32>} : memref<2x1024xf32, #tpu.memory_space<vmem>>, vector<2x1024xf32>,
    return
  }
  func.func @transform_0(%arg0: i32) -> (i32, i32) {
    %c0_i32 = arith.constant 0 : i32
    %c0_i32_0 = arith.constant 0 : i32
    return %arg0, %c0_i32 : i32, i32
  }
  func.func @transform_1(%arg0: i32) -> (i32, i32) {
    %c0_i32 = arith.constant 0 : i32
    %c0_i32_0 = arith.constant 0 : i32
    return %arg0, %c0_i32 : i32, i32
  }
}

</mosaic_0001>

<llo_original>
// kernel: tpu_custom_call.1
$region0: #{tpu_custom_call.1}
  #allocation0 [shape = 'u32[]', space=smem, size = 0x4, offset = 0x4, fixed_abs, tag = 'smem constant byte address 0x4 - core index']
  #allocation1 [shape = 'u32[72,128]{1,0:T(1,128)}', space=vmem, size = 0x9000, scoped, tag = 'internal scratch']
  %s0 = inlined_call_operand.hbm [shape: f32[2,1024], index: 0, kind: input, shape index: {}]
  %s1 = inlined_call_operand.hbm [shape: f32[2,1024], index: 1, kind: output, shape index: {}]
  %s2 = sld [smem:[#allocation0]]
  $region18: #{tpu_custom_call.1} parent=0
    _
  %s4 = ssub.s32 1, %s2
  %s5 = scalar_select 0, %s4, %s2
  $region1: #{tpu_custom_call.1} parent=0
    #allocation2 [shape = 'u8[8192]{0}', space=vmem, size = 0x2000, scoped, tag = 'input window, operand 0, single buffered']
    #allocation3 [shape = 's32[1]{0}', space=sflag, size = 0x4, scoped, tag = 'scoped memory for tpu_custom_call.1']
    #allocation4 [shape = 's32[1]{0}', space=sflag, size = 0x4, scoped, tag = 'scoped memory for tpu_custom_call.1']
    #allocation5 [shape = 'u8[8192]{0}', space=vmem, size = 0x2000, scoped, tag = 'output window, operand 0, single buffered']
    %6 = vsyncpa [#allocation3], 0
    %7 = vsyncpa [#allocation4], 0
    // Predicated region
    $region2: #{tpu_custom_call.1} parent=1 // pred_check
      _
    $region3: #{tpu_custom_call.1} parent=1 // pred_check_branch
      %9 = sbr.rel (0) target = $region5
    $region4: #{tpu_custom_call.1} parent=1 // pred_region
      %11 = vsyncadd [#allocation3], 0
      %s13 = sshll.u32 %s0, 4
      %s14 = int_to_ptr.hbm [resolvable:$true] %s13
      %s15 = sshll.u32 [#allocation2], 4
      %s16 = int_to_ptr.vmem [resolvable:$true] %s15
      %18 = dma.hbm_to_vmem [thread:$0]  %s14, 256, %s16, [#allocation3]
    $region5: #{tpu_custom_call.1} parent=1 // pred_fallthru
      _
    // Predicated region
    $region6: #{tpu_custom_call.1} parent=1 // pred_check
      _
    $region7: #{tpu_custom_call.1} parent=1 // pred_check_branch
      %20 = sbr.rel (0) target = $region9
    $region8: #{tpu_custom_call.1} parent=1 // pred_region
      %22 = dma.done [#allocation3], 256
    $region9: #{tpu_custom_call.1} parent=1 // pred_fallthru
      _
    %v23 = vld [vmem:[#allocation2] sm:$0xff]
    %v24 = vld [vmem:[#allocation2 + $0x8] sm:$0xff]
    %v25 = vmul.f32 %v23, 0.2
    %v26 = vmul.f32 %v24, 0.2
    %v27 = vmax.f32 %v23, %v25
    %v28 = vmax.f32 %v24, %v26
    %29 = vst [vmem:[#allocation5] sm:$0xff] %v27
    %30 = vst [vmem:[#allocation5 + $0x8] sm:$0xff] %v28
    // Predicated region
    $region10: #{tpu_custom_call.1} parent=1 // pred_check
      _
    $region11: #{tpu_custom_call.1} parent=1 // pred_check_branch
      %32 = sbr.rel (0) target = $region13
    $region12: #{tpu_custom_call.1} parent=1 // pred_region
      %34 = vsyncadd [#allocation4], 0
      %s36 = sshll.u32 [#allocation5], 4
      %s37 = int_to_ptr.vmem [resolvable:$true] %s36
      %s38 = sshll.u32 %s1, 4
      %s39 = int_to_ptr.hbm [resolvable:$true] %s38
      %41 = dma.vmem_to_hbm [thread:$0]  %s37, 256, %s39, [#allocation4]
    $region13: #{tpu_custom_call.1} parent=1 // pred_fallthru
      _
    // Predicated region
    $region14: #{tpu_custom_call.1} parent=1 // pred_check
      _
    $region15: #{tpu_custom_call.1} parent=1 // pred_check_branch
      %43 = sbr.rel (0) target = $region17
    $region16: #{tpu_custom_call.1} parent=1 // pred_region
      %45 = dma.done [#allocation4], 256
    $region17: #{tpu_custom_call.1} parent=1 // pred_fallthru
      _
    %46 = vsyncpa [#allocation3], 1
    %47 = vsyncpa [#allocation4], 1

</llo_original>
